<compile_context>
chip_gen: v5e
topology: v5e:2x2
jax: 0.10.0
libtpu: 0.0.40
codegen_flags: <defaults>
</compile_context>

<pallas_src>
import jax
import jax.numpy as jnp
from jax.experimental import pallas as pl
from jax.experimental.pallas import tpu as pltpu

LANE = 128  # lane-dense padded width for the hidden features


def emotions_kernel(x_ref, w1_ref, b1_ref, w2_ref, b2_ref, w3_ref, b3_ref,
                    o_ref):
    x = x_ref[...]                                                    # (TB, 52)
    h1 = jnp.dot(x, w1_ref[...], preferred_element_type=jnp.float32) + b1_ref[...]
    h1 = jnp.maximum(h1, 0.0)                                         # (TB, 128), padded lanes = 0
    h2 = jnp.dot(h1, w2_ref[...], preferred_element_type=jnp.float32) + b2_ref[...]
    h2 = jnp.maximum(h2, 0.0)                                         # (TB, 128), padded lanes = 0
    logits = jnp.dot(h2, w3_ref[...], preferred_element_type=jnp.float32) + b3_ref[...]
    # Padded logit columns carry a baked-in -1e30 bias -> exp() flushes them
    # to exactly 0; no in-kernel masking needed.
    m = jnp.max(logits, axis=-1, keepdims=True)
    e = jnp.exp(logits - m)
    denom = jnp.sum(e, axis=-1, keepdims=True)
    inv = pl.reciprocal(denom, approx=True)          # EUP slot
    inv = inv * (2.0 - denom * inv)                  # one Newton step -> near-exact
    o_ref[...] = e * inv


def _pad2(a, rows, cols, fill=0.0):
    return jnp.pad(a, ((0, rows - a.shape[0]), (0, cols - a.shape[1])),
                   constant_values=fill)


def prepare_params(w1, b1, w2, b2, w3, b3):
    """One-time host-side padding to the kernel's lane-dense layout.

    Weights are stored as (in, out); biases as (1, out).  Returns the padded
    parameter tuple and the true output dim.
    """
    f_in = w1.shape[0]
    dim = w3.shape[1]
    out_pad = max(8, -(-dim // 8) * 8)   # next multiple of 8 >= dim

    w1p = _pad2(w1.astype(jnp.float32), f_in, LANE)
    b1p = _pad2(b1.astype(jnp.float32), 1, LANE)
    w2p = _pad2(w2.astype(jnp.float32), LANE, LANE)
    b2p = _pad2(b2.astype(jnp.float32), 1, LANE)
    w3p = _pad2(w3.astype(jnp.float32), LANE, out_pad)
    # Bake the softmax mask into the bias padding: padded logit columns get a
    # large (finite) negative bias so exp() flushes them to exactly 0.
    b3p = _pad2(b3.astype(jnp.float32), 1, out_pad, fill=-1e30)
    return (w1p, b1p, w2p, b2p, w3p, b3p), dim


def emotions_net(x, padded_params, dim, *, tile_rows=2048):
    """x: (B, 52) f32; padded_params from prepare_params()."""
    w1p, b1p, w2p, b2p, w3p, b3p = padded_params
    B, f_in = x.shape
    out_pad = w3p.shape[1]

    # Batch tile: large enough to amortize the ~0.35us per-step overhead, but
    # keep >= 2 grid steps when B permits so v7x can shard the batch across
    # both TensorCores.  Always a multiple of 8 sublanes.
    tb = min(tile_rows, B)
    if B >= 16:
        tb = min(tb, pl.cdiv(B, 2))
    tb = max(8, -(-tb // 8) * 8)
    grid = (pl.cdiv(B, tb),)

    def resident(shape):
        # Whole-array block, same block every grid step -> stays VMEM-resident.
        return pl.BlockSpec(shape, lambda i: (0, 0))

    weight_bytes = sum(int(a.size) * a.dtype.itemsize for a in padded_params)
    cost = pl.CostEstimate(
        flops=2 * B * (f_in * LANE + LANE * LANE + LANE * out_pad),
        transcendentals=B * (out_pad + 1),
        bytes_accessed=B * (f_in + out_pad) * 4 + weight_bytes,
    )

    out_padded = pl.pallas_call(
        emotions_kernel,
        out_shape=jax.ShapeDtypeStruct((B, out_pad), jnp.float32),
        grid=grid,
        in_specs=[
            pl.BlockSpec((tb, f_in), lambda i: (i, 0)),      # x: tiled over batch
            resident(w1p.shape), resident(b1p.shape),
            resident(w2p.shape), resident(b2p.shape),
            resident(w3p.shape), resident(b3p.shape),
        ],
        out_specs=pl.BlockSpec((tb, out_pad), lambda i: (i, 0)),
        compiler_params=pltpu.CompilerParams(
            dimension_semantics=("parallel",)),
        cost_estimate=cost,
    )(x, w1p, b1p, w2p, b2p, w3p, b3p)

    return out_padded[:, :dim] if out_pad != dim else out_padded


def init_params(key, dim):
    """Deterministic init; shapes match nn.Linear(52,24), (24,12), (12,dim)."""
    ks = jax.random.split(key, 6)

    def linear(kw, kb, fan_in, fan_out):
        bound = 1.0 / jnp.sqrt(fan_in)
        w = jax.random.uniform(kw, (fan_in, fan_out), jnp.float32, -bound, bound)
        b = jax.random.uniform(kb, (1, fan_out), jnp.float32, -bound, bound)
        return w, b

    w1, b1 = linear(ks[0], ks[1], 52, 24)
    w2, b2 = linear(ks[2], ks[3], 24, 12)
    w3, b3 = linear(ks[4], ks[5], 12, dim)
    return w1, b1, w2, b2, w3, b3


def reference(x, w1, b1, w2, b2, w3, b3):
    h1 = jax.nn.relu(x @ w1 + b1)
    h2 = jax.nn.relu(h1 @ w2 + b2)
    return jax.nn.softmax(h2 @ w3 + b3, axis=1)


if __name__ == "__main__":
    labels = ["angry", "happy", "sad", "neutral", "fear", "surprise", "disgust"]
    dim = len(labels)

    key = jax.random.PRNGKey(0)
    kx, kp = jax.random.split(key)
    raw_params = init_params(kp, dim)
    padded_params, dim_out = prepare_params(*raw_params)   # hoisted out of the hot path

    # Small batch (single grid step).
    B = 8
    x = jax.random.normal(kx, (B, 52), jnp.float32)
    out = jax.block_until_ready(emotions_net(x, padded_params, dim_out))
    ref = reference(x, *raw_params)
    assert out.shape == (B, dim)
    assert jnp.allclose(out, ref, atol=1e-3, rtol=1e-3)
    assert jnp.allclose(jnp.sum(out, axis=1), jnp.ones((B,)), atol=1e-3)

    # Larger batch exercises the multi-step, pipelined, parallel batch grid
    # (tb is capped at B/2 so the grid has >= 2 steps for v7x megacore).
    B2 = 1024
    x2 = jax.random.normal(kx, (B2, 52), jnp.float32)
    out2 = jax.block_until_ready(emotions_net(x2, padded_params, dim_out))
    ref2 = reference(x2, *raw_params)
    assert out2.shape == (B2, dim)
    assert jnp.allclose(out2, ref2, atol=1e-3, rtol=1e-3)
    assert jnp.allclose(jnp.sum(out2, axis=1), jnp.ones((B2,)), atol=1e-3)

    print("KERNEL_OK")
</pallas_src>

<mosaic_0001>
module attributes {stable_mosaic.version = 11 : i64} {
  func.func @emotions_kernel(%arg0: i32, %arg1: memref<8x52xf32, #tpu.memory_space<vmem>>, %arg2: memref<52x128xf32, #tpu.memory_space<vmem>>, %arg3: memref<1x128xf32, #tpu.memory_space<vmem>>, %arg4: memref<128x128xf32, #tpu.memory_space<vmem>>, %arg5: memref<1x128xf32, #tpu.memory_space<vmem>>, %arg6: memref<128x8xf32, #tpu.memory_space<vmem>>, %arg7: memref<1x8xf32, #tpu.memory_space<vmem>>, %arg8: memref<8x8xf32, #tpu.memory_space<vmem>>) attributes {dimension_semantics = [#tpu.dimension_semantics<parallel>], iteration_bounds = array<i64: 1>, scalar_prefetch = 0 : i64, scratch_operands = 0 : i64, tpu.core_type = #tpu.core_type<tc>, window_params = [{transform_indices = @transform_0, window_bounds = array<i64: 8, 52>}, {pipeline_mode = #tpu.pipeline_mode<synchronous>, transform_indices = @transform_1, window_bounds = array<i64: 52, 128>}, {pipeline_mode = #tpu.pipeline_mode<synchronous>, transform_indices = @transform_2, window_bounds = array<i64: 1, 128>}, {pipeline_mode = #tpu.pipeline_mode<synchronous>, transform_indices = @transform_3, window_bounds = array<i64: 128, 128>}, {pipeline_mode = #tpu.pipeline_mode<synchronous>, transform_indices = @transform_4, window_bounds = array<i64: 1, 128>}, {pipeline_mode = #tpu.pipeline_mode<synchronous>, transform_indices = @transform_5, window_bounds = array<i64: 128, 8>}, {pipeline_mode = #tpu.pipeline_mode<synchronous>, transform_indices = @transform_6, window_bounds = array<i64: 1, 8>}, {transform_indices = @transform_7, window_bounds = array<i64: 8, 8>}]} {
    %c0 = arith.constant 0 : index
    %c0_0 = arith.constant 0 : index
    %0 = vector.load %arg1[%c0, %c0_0] : memref<8x52xf32, #tpu.memory_space<vmem>>, vector<8x52xf32>
    %c0_1 = arith.constant 0 : index
    %c0_2 = arith.constant 0 : index
    %1 = vector.load %arg2[%c0_1, %c0_2] : memref<52x128xf32, #tpu.memory_space<vmem>>, vector<52x128xf32>
    %cst = arith.constant dense<0.000000e+00> : vector<8x128xf32>
    %2 = tpu.matmul %0, %1, %cst {dimension_numbers = #tpu.dot_dimension_numbers<[1], [0], [0], [1], [0, 0, 1, 1], [], []>} : vector<8x52xf32>, vector<52x128xf32>, vector<8x128xf32> -> vector<8x128xf32>
    %c0_3 = arith.constant 0 : index
    %c0_4 = arith.constant 0 : index
    %3 = vector.load %arg3[%c0_3, %c0_4] : memref<1x128xf32, #tpu.memory_space<vmem>>, vector<1x128xf32>
    %4 = vector.broadcast %3 : vector<1x128xf32> to vector<8x128xf32>
    %5 = arith.addf %2, %4 : vector<8x128xf32>
    %cst_5 = arith.constant 0.000000e+00 : f32
    %6 = vector.broadcast %cst_5 : f32 to vector<8x128xf32>
    %7 = arith.maximumf %5, %6 : vector<8x128xf32>
    %c0_6 = arith.constant 0 : index
    %c0_7 = arith.constant 0 : index
    %8 = vector.load %arg4[%c0_6, %c0_7] : memref<128x128xf32, #tpu.memory_space<vmem>>, vector<128x128xf32>
    %cst_8 = arith.constant dense<0.000000e+00> : vector<8x128xf32>
    %9 = tpu.matmul %7, %8, %cst_8 {dimension_numbers = #tpu.dot_dimension_numbers<[1], [0], [0], [1], [0, 0, 1, 1], [], []>} : vector<8x128xf32>, vector<128x128xf32>, vector<8x128xf32> -> vector<8x128xf32>
    %c0_9 = arith.constant 0 : index
    %c0_10 = arith.constant 0 : index
    %10 = vector.load %arg5[%c0_9, %c0_10] : memref<1x128xf32, #tpu.memory_space<vmem>>, vector<1x128xf32>
    %11 = vector.broadcast %10 : vector<1x128xf32> to vector<8x128xf32>
    %12 = arith.addf %9, %11 : vector<8x128xf32>
    %cst_11 = arith.constant 0.000000e+00 : f32
    %13 = vector.broadcast %cst_11 : f32 to vector<8x128xf32>
    %14 = arith.maximumf %12, %13 : vector<8x128xf32>
    %c0_12 = arith.constant 0 : index
    %c0_13 = arith.constant 0 : index
    %15 = vector.load %arg6[%c0_12, %c0_13] : memref<128x8xf32, #tpu.memory_space<vmem>>, vector<128x8xf32>
    %cst_14 = arith.constant dense<0.000000e+00> : vector<8x8xf32>
    %16 = tpu.matmul %14, %15, %cst_14 {dimension_numbers = #tpu.dot_dimension_numbers<[1], [0], [0], [1], [0, 0, 1, 1], [], []>} : vector<8x128xf32>, vector<128x8xf32>, vector<8x8xf32> -> vector<8x8xf32>
    %c0_15 = arith.constant 0 : index
    %c0_16 = arith.constant 0 : index
    %17 = vector.load %arg7[%c0_15, %c0_16] : memref<1x8xf32, #tpu.memory_space<vmem>>, vector<1x8xf32>
    %18 = vector.broadcast %17 : vector<1x8xf32> to vector<8x8xf32>
    %19 = arith.addf %16, %18 : vector<8x8xf32>
    %cst_17 = arith.constant dense<0xFF800000> : vector<8xf32>
    %20 = vector.multi_reduction <maximumf>, %19, %cst_17 [1] : vector<8x8xf32> to vector<8xf32>
    %21 = vector.shape_cast %20 : vector<8xf32> to vector<8x1xf32>
    %22 = vector.broadcast %21 : vector<8x1xf32> to vector<8x8xf32>
    %23 = arith.subf %19, %22 : vector<8x8xf32>
    %24 = math.exp %23 : vector<8x8xf32>
    %cst_18 = arith.constant dense<0.000000e+00> : vector<8xf32>
    %25 = vector.multi_reduction <add>, %24, %cst_18 [1] : vector<8x8xf32> to vector<8xf32>
    %26 = vector.shape_cast %25 : vector<8xf32> to vector<8x1xf32>
    %27 = tpu.reciprocal %26 {approx = true} : vector<8x1xf32> -> vector<8x1xf32>
    %28 = arith.mulf %26, %27 : vector<8x1xf32>
    %cst_19 = arith.constant 2.000000e+00 : f32
    %29 = vector.broadcast %cst_19 : f32 to vector<8x1xf32>
    %30 = arith.subf %29, %28 : vector<8x1xf32>
    %31 = arith.mulf %27, %30 : vector<8x1xf32>
    %32 = vector.broadcast %31 : vector<8x1xf32> to vector<8x8xf32>
    %33 = arith.mulf %24, %32 : vector<8x8xf32>
    %c0_20 = arith.constant 0 : index
    %c0_21 = arith.constant 0 : index
    %34 = vector.load %arg8[%c0_20, %c0_21] : memref<8x8xf32, #tpu.memory_space<vmem>>, vector<8x8xf32>
    tpu.vector_store %arg8[%c0_20, %c0_21], %33 {strides = array<i32>} : memref<8x8xf32, #tpu.memory_space<vmem>>, vector<8x8xf32>,
    return
  }
  func.func @transform_0(%arg0: i32) -> (i32, i32) {
    %c0_i32 = arith.constant 0 : i32
    %c0_i32_0 = arith.constant 0 : i32
    return %arg0, %c0_i32 : i32, i32
  }
  func.func @transform_1(%arg0: i32) -> (i32, i32) {
    %c0_i32 = arith.constant 0 : i32
    %c0_i32_0 = arith.constant 0 : i32
    %c0_i32_1 = arith.constant 0 : i32
    return %c0_i32, %c0_i32_0 : i32, i32
  }
  func.func @transform_2(%arg0: i32) -> (i32, i32) {
    %c0_i32 = arith.constant 0 : i32
    %c0_i32_0 = arith.constant 0 : i32
    %c0_i32_1 = arith.constant 0 : i32
    return %c0_i32, %c0_i32_0 : i32, i32
  }
  func.func @transform_3(%arg0: i32) -> (i32, i32) {
    %c0_i32 = arith.constant 0 : i32
    %c0_i32_0 = arith.constant 0 : i32
    %c0_i32_1 = arith.constant 0 : i32
    return %c0_i32, %c0_i32_0 : i32, i32
  }
  func.func @transform_4(%arg0: i32) -> (i32, i32) {
    %c0_i32 = arith.constant 0 : i32
    %c0_i32_0 = arith.constant 0 : i32
    %c0_i32_1 = arith.constant 0 : i32
    return %c0_i32, %c0_i32_0 : i32, i32
  }
  func.func @transform_5(%arg0: i32) -> (i32, i32) {
    %c0_i32 = arith.constant 0 : i32
    %c0_i32_0 = arith.constant 0 : i32
    %c0_i32_1 = arith.constant 0 : i32
    return %c0_i32, %c0_i32_0 : i32, i32
  }
  func.func @transform_6(%arg0: i32) -> (i32, i32) {
    %c0_i32 = arith.constant 0 : i32
    %c0_i32_0 = arith.constant 0 : i32
    %c0_i32_1 = arith.constant 0 : i32
    return %c0_i32, %c0_i32_0 : i32, i32
  }
  func.func @transform_7(%arg0: i32) -> (i32, i32) {
    %c0_i32 = arith.constant 0 : i32
    %c0_i32_0 = arith.constant 0 : i32
    return %arg0, %c0_i32 : i32, i32
  }
}

</mosaic_0001>

<llo_original>
// kernel: tpu_custom_call.1
$region0: #{tpu_custom_call.1}
  #allocation0 [shape = 'u32[]', space=smem, size = 0x4, offset = 0x4, fixed_abs, tag = 'smem constant byte address 0x4 - core index']
  #allocation1 [shape = 'u32[72,128]{1,0:T(1,128)}', space=vmem, size = 0x9000, scoped, tag = 'internal scratch']
  %s0 = inlined_call_operand.vmem [shape: f32[8,52], index: 0, kind: input, shape index: {}]
  %s1 = inlined_call_operand.hbm [shape: f32[52,128], index: 1, kind: input, shape index: {}]
  %s2 = inlined_call_operand.vmem [shape: f32[1,128], index: 2, kind: input, shape index: {}]
  %s3 = inlined_call_operand.vmem [shape: f32[128,128], index: 3, kind: input, shape index: {}]
  %s4 = inlined_call_operand.vmem [shape: f32[1,128], index: 4, kind: input, shape index: {}]
  %s5 = inlined_call_operand.vmem [shape: f32[128,8], index: 5, kind: input, shape index: {}]
  %s6 = inlined_call_operand.vmem [shape: f32[1,8], index: 6, kind: input, shape index: {}]
  %s7 = inlined_call_operand.hbm [shape: f32[8,8], index: 7, kind: output, shape index: {}]
  %s8 = sld [smem:[#allocation0]]
  $region42: #{tpu_custom_call.1} parent=0
    _
  %s10 = ssub.s32 1, %s8
  %s11 = scalar_select 0, %s10, %s8
  $region1: #{tpu_custom_call.1} parent=0
    #allocation2 [shape = 'u8[28672]{0}', space=vmem, size = 0x7000, scoped, tag = 'input window, operand 1, single buffered']
    #allocation3 [shape = 's32[1]{0}', space=sflag, size = 0x4, scoped, tag = 'scoped memory for tpu_custom_call.1']
    #allocation4 [shape = 's32[1]{0}', space=sflag, size = 0x4, scoped, tag = 'scoped memory for tpu_custom_call.1']
    #allocation5 [shape = 'u8[4096]{0}', space=vmem, size = 0x1000, scoped, tag = 'output window, operand 0, single buffered']
    %12 = vsyncpa [#allocation3], 0
    %13 = vsyncpa [#allocation4], 0
    // Predicated region
    $region2: #{tpu_custom_call.1} parent=1 // pred_check
      _
    $region3: #{tpu_custom_call.1} parent=1 // pred_check_branch
      %15 = sbr.rel (0) target = $region5
    $region4: #{tpu_custom_call.1} parent=1 // pred_region
      _
    $region5: #{tpu_custom_call.1} parent=1 // pred_fallthru
      _
    // Predicated region
    $region6: #{tpu_custom_call.1} parent=1 // pred_check
      _
    $region7: #{tpu_custom_call.1} parent=1 // pred_check_branch
      %17 = sbr.rel (0) target = $region9
    $region8: #{tpu_custom_call.1} parent=1 // pred_region
      %19 = vsyncadd [#allocation3], 0
      %s20 = sshll.u32 %s1, 4
      %s21 = int_to_ptr.hbm [resolvable:$true] %s20
      %s22 = sshll.u32 [#allocation2], 4
      %s23 = int_to_ptr.vmem [resolvable:$true] %s22
      %28 = dma.hbm_to_vmem [thread:$0]  %s21, 896, %s23, [#allocation3], 128, 128, 8
    $region9: #{tpu_custom_call.1} parent=1 // pred_fallthru
      _
    // Predicated region
    $region10: #{tpu_custom_call.1} parent=1 // pred_check
      _
    $region11: #{tpu_custom_call.1} parent=1 // pred_check_branch
      %30 = sbr.rel (0) target = $region13
    $region12: #{tpu_custom_call.1} parent=1 // pred_region
      _
    $region13: #{tpu_custom_call.1} parent=1 // pred_fallthru
      _
    // Predicated region
    $region14: #{tpu_custom_call.1} parent=1 // pred_check
      _
    $region15: #{tpu_custom_call.1} parent=1 // pred_check_branch
      %32 = sbr.rel (0) target = $region17
    $region16: #{tpu_custom_call.1} parent=1 // pred_region
      _
    $region17: #{tpu_custom_call.1} parent=1 // pred_fallthru
      _
    // Predicated region
    $region18: #{tpu_custom_call.1} parent=1 // pred_check
      _
    $region19: #{tpu_custom_call.1} parent=1 // pred_check_branch
      %34 = sbr.rel (0) target = $region21
    $region20: #{tpu_custom_call.1} parent=1 // pred_region
      _
    $region21: #{tpu_custom_call.1} parent=1 // pred_fallthru
      _
    // Predicated region
    $region22: #{tpu_custom_call.1} parent=1 // pred_check
      _
    $region23: #{tpu_custom_call.1} parent=1 // pred_check_branch
      %36 = sbr.rel (0) target = $region25
    $region24: #{tpu_custom_call.1} parent=1 // pred_region
      _
    $region25: #{tpu_custom_call.1} parent=1 // pred_fallthru
      _
    // Predicated region
    $region26: #{tpu_custom_call.1} parent=1 // pred_check
      _
    $region27: #{tpu_custom_call.1} parent=1 // pred_check_branch
      %38 = sbr.rel (0) target = $region29
    $region28: #{tpu_custom_call.1} parent=1 // pred_region
      _
    $region29: #{tpu_custom_call.1} parent=1 // pred_fallthru
      _
    // Predicated region
    $region30: #{tpu_custom_call.1} parent=1 // pred_check
      _
    $region31: #{tpu_custom_call.1} parent=1 // pred_check_branch
      %40 = sbr.rel (0) target = $region33
    $region32: #{tpu_custom_call.1} parent=1 // pred_region
      %42 = dma.done [#allocation3], 896
    $region33: #{tpu_custom_call.1} parent=1 // pred_fallthru
      _
    %v43 = vld [vmem:[%s0] sm:$0xff]
    %v44 = vld [vmem:[#allocation2] sm:$0xff]
    %v45 = vld [vmem:[#allocation2 + $0x8] sm:$0xff]
    %v46 = vld [vmem:[#allocation2 + $0x10] sm:$0xff]
    %v47 = vld [vmem:[#allocation2 + $0x18] sm:$0xff]
    %v48 = vld [vmem:[#allocation2 + $0x20] sm:$0xff]
    %v49 = vld [vmem:[#allocation2 + $0x28] sm:$0xff]
    %v50 = vld [vmem:[#allocation2 + $0x30] sm:$0xf]
    %v51 = vld [vmem:[%s2] sm:$0x1]
    %v53 = vperm.slane %v51, 0
    %vm55 = vcmask 424960
    %v57 = vsel %vm55, %v43, 0
    %vm59 = vcmask 1043456
    %v61 = vsel %vm59, %v50, 0
    %63 = vmatpush.msra.mxu0 0.0
    %64 = vmatpush.msra.mxu0 0.0
    %65 = vmatpush.msra.mxu0 0.0
    %66 = vmatpush.msra.mxu0 0.0
    %67 = vmatpush.msra.mxu0 0.0
    %68 = vmatpush.msra.mxu0 0.0
    %69 = vmatpush.msra.mxu0 0.0
    %70 = vmatpush.msra.mxu0 0.0
    %71 = vmatpush.msra.mxu0 0.0
    %72 = vmatpush.msra.mxu0 %v61
    %73 = vmatpush.msra.mxu0 %v49
    %74 = vmatpush.msra.mxu0 %v48
    %75 = vmatpush.msra.mxu0 %v47
    %76 = vmatpush.msra.mxu0 %v46
    %77 = vmatpush.msra.mxu0 %v45
    %78 = vmatpush.msra.mxu0 %v44
    %79 = vmatmul.f32.gmra.mxu0 %v57
    %v80 = vpop.f32.mrf.mxu0
    %v81 = vadd.f32 %v53, %v80
    %82 = vdwg.mxu0
    %v83 = vmax.f32 %v81, 0.0
    %v84 = vld [vmem:[%s3] sm:$0xff]
    %v85 = vld [vmem:[%s3 + $0x8] sm:$0xff]
    %v86 = vld [vmem:[%s3 + $0x10] sm:$0xff]
    %v87 = vld [vmem:[%s3 + $0x18] sm:$0xff]
    %v88 = vld [vmem:[%s3 + $0x20] sm:$0xff]
    %v89 = vld [vmem:[%s3 + $0x28] sm:$0xff]
    %v90 = vld [vmem:[%s3 + $0x30] sm:$0xff]
    %v91 = vld [vmem:[%s3 + $0x38] sm:$0xff]
    %v92 = vld [vmem:[%s3 + $0x40] sm:$0xff]
    %v93 = vld [vmem:[%s3 + $0x48] sm:$0xff]
    %v94 = vld [vmem:[%s3 + $0x50] sm:$0xff]
    %v95 = vld [vmem:[%s3 + $0x58] sm:$0xff]
    %v96 = vld [vmem:[%s3 + $0x60] sm:$0xff]
    %v97 = vld [vmem:[%s3 + $0x68] sm:$0xff]
    %v98 = vld [vmem:[%s3 + $0x70] sm:$0xff]
    %v99 = vld [vmem:[%s3 + $0x78] sm:$0xff]
    %v100 = vld [vmem:[%s4] sm:$0x1]
    %v102 = vperm.slane %v100, 0
    %104 = vmatpush.msra.mxu0 %v99
    %105 = vmatpush.msra.mxu0 %v98
    %106 = vmatpush.msra.mxu0 %v97
    %107 = vmatpush.msra.mxu0 %v96
    %108 = vmatpush.msra.mxu0 %v95
    %109 = vmatpush.msra.mxu0 %v94
    %110 = vmatpush.msra.mxu0 %v93
    %111 = vmatpush.msra.mxu0 %v92
    %112 = vmatpush.msra.mxu0 %v91
    %113 = vmatpush.msra.mxu0 %v90
    %114 = vmatpush.msra.mxu0 %v89
    %115 = vmatpush.msra.mxu0 %v88
    %116 = vmatpush.msra.mxu0 %v87
    %117 = vmatpush.msra.mxu0 %v86
    %118 = vmatpush.msra.mxu0 %v85
    %119 = vmatpush.msra.mxu0 %v84
    %120 = vmatmul.f32.gmra.mxu0 %v83
    %v121 = vpop.f32.mrf.mxu0
    %v122 = vadd.f32 %v102, %v121
    %123 = vdwg.mxu0
    %v124 = vmax.f32 %v122, 0.0
    %v125 = vld [vmem:[%s5] sm:$0xff]
    %v126 = vld [vmem:[%s5 + $0x8] sm:$0xff]
    %v127 = vld [vmem:[%s5 + $0x10] sm:$0xff]
    %v128 = vld [vmem:[%s5 + $0x18] sm:$0xff]
    %v129 = vld [vmem:[%s5 + $0x20] sm:$0xff]
    %v130 = vld [vmem:[%s5 + $0x28] sm:$0xff]
    %v131 = vld [vmem:[%s5 + $0x30] sm:$0xff]
    %v132 = vld [vmem:[%s5 + $0x38] sm:$0xff]
    %v133 = vld [vmem:[%s5 + $0x40] sm:$0xff]
    %v134 = vld [vmem:[%s5 + $0x48] sm:$0xff]
    %v135 = vld [vmem:[%s5 + $0x50] sm:$0xff]
    %v136 = vld [vmem:[%s5 + $0x58] sm:$0xff]
    %v137 = vld [vmem:[%s5 + $0x60] sm:$0xff]
    %v138 = vld [vmem:[%s5 + $0x68] sm:$0xff]
    %v139 = vld [vmem:[%s5 + $0x70] sm:$0xff]
    %v140 = vld [vmem:[%s5 + $0x78] sm:$0xff]
    %v141 = vld [vmem:[%s6] sm:$0x1]
    %v143 = vperm.slane %v141, 0
    %145 = vmatpush.msra.mxu0 %v140
    %146 = vmatpush.msra.mxu0 %v139
    %147 = vmatpush.msra.mxu0 %v138
    %148 = vmatpush.msra.mxu0 %v137
    %149 = vmatpush.msra.mxu0 %v136
    %150 = vmatpush.msra.mxu0 %v135
    %151 = vmatpush.msra.mxu0 %v134
    %152 = vmatpush.msra.mxu0 %v133
    %153 = vmatpush.msra.mxu0 %v132
    %154 = vmatpush.msra.mxu0 %v131
    %155 = vmatpush.msra.mxu0 %v130
    %156 = vmatpush.msra.mxu0 %v129
    %157 = vmatpush.msra.mxu0 %v128
    %158 = vmatpush.msra.mxu0 %v127
    %159 = vmatpush.msra.mxu0 %v126
    %160 = vmatpush.msra.mxu0 %v125
    %161 = vmatmul.f32.gmra.mxu0 %v124
    %v162 = vpop.f32.mrf.mxu0
    %v163 = vadd.f32 %v143, %v162
    %164 = vdwg.mxu0
    %vm165 = vcmask 64512
    %v166 = vsel %vm165, %v163, -inf
    %167 = vmax.xlane.f32.xlu0 %v166
    %v168 = vpop.xlane.xlu0 %167
    %v169 = vsub.f32 %v163, %v168
    %v170 = vmul.f32 %v169, 1.442695
    %v171 = vpow.pop %v170
    %v172 = vsel %vm165, %v171, 0.0
    %173 = vadd.xlane.f32.xlu0 %v172
    %v174 = vpop.xlane.xlu0 %173
    %v175 = vrcp.pop %v174
    %v176 = vmul.f32 %v174, %v175
    %v177 = vsub.f32 2.0, %v176
    %v178 = vmul.f32 %v175, %v177
    %v179 = vmul.f32 %v171, %v178
    %180 = vst.msk [vmem:[#allocation5] sm:$0xff] %vm165, %v179
    // Predicated region
    $region34: #{tpu_custom_call.1} parent=1 // pred_check
      _
    $region35: #{tpu_custom_call.1} parent=1 // pred_check_branch
      %182 = sbr.rel (0) target = $region37
    $region36: #{tpu_custom_call.1} parent=1 // pred_region
      %184 = vsyncadd [#allocation4], 0
      %s186 = sshll.u32 [#allocation5], 4
      %s187 = int_to_ptr.vmem [resolvable:$true] %s186
      %s188 = sshll.u32 %s7, 4
      %s189 = int_to_ptr.hbm [resolvable:$true] %s188
      %191 = dma.vmem_to_hbm [thread:$0]  %s187, 128, %s189, [#allocation4]
    $region37: #{tpu_custom_call.1} parent=1 // pred_fallthru
      _
    // Predicated region
    $region38: #{tpu_custom_call.1} parent=1 // pred_check
      _
    $region39: #{tpu_custom_call.1} parent=1 // pred_check_branch
      %193 = sbr.rel (0) target = $region41
    $region40: #{tpu_custom_call.1} parent=1 // pred_region
      %195 = dma.done [#allocation4], 128
    $region41: #{tpu_custom_call.1} parent=1 // pred_fallthru
      _
    %196 = vsyncpa [#allocation3], 1
    %197 = vsyncpa [#allocation4], 1

</llo_original>
